<compile_context>
chip_gen: v6e
topology: v6e:2x2x1
jax: 0.10.0
libtpu: 0.0.40
codegen_flags: <defaults>
</compile_context>

<pallas_src>
import functools

import jax
import jax.numpy as jnp
from jax.experimental import pallas as pl
from jax.experimental.pallas import tpu as pltpu


def _cdiv(a, b):
    return -(-a // b)


def _round_up(x, m):
    return (x + m - 1) // m * m


def _poly_loss_kernel(logits_ref, target_ref, wrow_ref, out_ref, ce_acc, pt_acc, *,
                      ignore_index, n_rows, n_classes):
    k = pl.program_id(1)
    n_inner = pl.num_programs(1)

    @pl.when(k == 0)
    def _init():
        ce_acc[...] = jnp.zeros_like(ce_acc)
        pt_acc[...] = jnp.zeros_like(pt_acc)

    x = logits_ref[...]                       # (tile_n, C) native dtype (no f32 upcast)
    tgt = target_ref[...]                     # (tile_n, 1) int32
    wt = wrow_ref[...]                        # (tile_n, 1) f32 = weight[target]
    tn, cp = x.shape

    # Global row ids of this tile (unclamped). Rows >= n_rows are either the garbage
    # tail of the last partial block or a duplicated (clamped) block of a grid point
    # past the end -- both must contribute exactly 0.
    block_idx = pl.program_id(0) * n_inner + k
    row_ids = block_idx * tn + jax.lax.broadcasted_iota(jnp.int32, (tn, 1), 0)
    row_ok = row_ids < n_rows

    # (1, C) lane iota; the compare broadcasts against the (tile_n, 1) targets.
    col = jax.lax.broadcasted_iota(jnp.int32, (1, cp), 1)
    onehot = col == tgt                                       # (tile_n, C) bool

    # True-class logit and row max in the *native* dtype (exact: max returns an input
    # value; the masked sum has exactly one nonzero term per row), then upcast.
    zero = jnp.zeros((), dtype=x.dtype)
    xt = jnp.sum(jnp.where(onehot, x, zero), axis=-1, keepdims=True).astype(jnp.float32)
    m = jnp.max(x, axis=-1, keepdims=True).astype(jnp.float32)

    # exp / sum-exp / log / reciprocal in f32 (EUP path) for accuracy.
    s = jnp.sum(jnp.exp(x.astype(jnp.float32) - m), axis=-1, keepdims=True)
    inv_s = pl.reciprocal(s, approx=False)

    in_range = jnp.logical_and(tgt >= 0, tgt < n_classes)     # all-zero one-hot otherwise
    not_ignored = tgt != ignore_index
    pt_mask = jnp.logical_and(in_range, row_ok)
    ce_mask = jnp.logical_and(pt_mask, not_ignored)

    pt = jnp.where(pt_mask, jnp.exp(xt - m) * inv_s, 0.0)     # (tile_n, 1)
    logpt = (xt - m) - jnp.log(s)
    ce = jnp.where(ce_mask, -logpt * wt, 0.0)                 # (tile_n, 1)

    # Per-row VMEM accumulators: pure VALU adds each step; collapse to the two
    # scalars only once, at finalize.
    ce_acc[...] += ce
    pt_acc[...] += pt

    @pl.when(k == n_inner - 1)
    def _finalize():
        ce_sum = jnp.sum(ce_acc[...])
        pt_sum = jnp.sum(pt_acc[...])
        lane = jax.lax.broadcasted_iota(jnp.int32, (1, 8, 128), 2)
        out_ref[...] = jnp.where(lane == 0, ce_sum,
                                 jnp.where(lane == 1, pt_sum, 0.0))


def poly_loss(logits, target, weight, *, epsilon=1.0, ignore_index=-100, tile_n=None):
    """logits: (N, C) float (any float dtype); target: (N,) int; weight: (C,) float -> scalar f32."""
    # TODO(synk): the optional `mask` gather path (dynamic-size boolean row filter) is not
    # implemented; mask=None path only.
    # TODO(synk): for extremely large vocabularies (where even a 16-row block of classes
    # exceeds VMEM) an online-softmax C-tiling pass over 128-lane chunks would be needed.
    N, C = logits.shape
    itemsize = jnp.dtype(logits.dtype).itemsize
    c_vmem = _round_up(C, 128)                # in-VMEM lane footprint of one row

    # Generation-aware VMEM budget (v7x has 64 MiB/TC vs 128 MiB on v5e/v6e).
    try:
        vmem_cap = int(pltpu.get_tpu_info().vmem_capacity_bytes)
    except Exception:                          # conservative fallback (v7x-sized)
        vmem_cap = 64 * 2**20
    vmem_budget = (vmem_cap * 3) // 4

    # Per-row VMEM cost: double-buffered native-dtype logits block + ~3 f32-sized
    # temporaries kept live while reducing over classes.
    per_row_vmem = 2 * c_vmem * itemsize + 3 * c_vmem * 4
    rows_budget = max(16, ((vmem_budget - (4 << 20)) // per_row_vmem) // 16 * 16)

    if tile_n is None:
        # Target ~4 MiB of HBM bytes per logits DMA so per-grid-step overhead
        # (~0.35 us) amortizes even for small class counts.
        tile_n = max(512, ((4 << 20) // max(1, C * itemsize)) // 16 * 16)
    tile_n = int(max(16, min(_round_up(int(tile_n), 16), rows_budget, _round_up(N, 16))))

    nblocks = _cdiv(N, tile_n)
    # Two independent partial reductions: the leading "parallel" axis lets the runtime
    # split the row blocks across v7x's two TensorCores; on 1-TC chips it is the same
    # serial loop. The 2-way combine + epsilon term happen in the wrapper.
    n_partials = 2 if nblocks >= 2 else 1
    n_inner = _cdiv(nblocks, n_partials)
    last_block = nblocks - 1

    def _row_block(p, k):
        # Clamp so the (at most one) grid point past the end re-reads the last block;
        # its rows are masked out in-kernel via the global row index.
        return (jnp.minimum(p * n_inner + k, last_block), 0)

    tgt = target.astype(jnp.int32)
    safe_t = jnp.clip(tgt, 0, C - 1)
    w_rows = jnp.asarray(weight, jnp.float32)[safe_t].reshape(N, 1)   # weight[target], gathered once
    tgt2 = tgt.reshape(N, 1)

    vmem_limit = int(min(vmem_cap * 9 // 10,
                         max(32 << 20, tile_n * per_row_vmem + (4 << 20))))

    kernel = functools.partial(
        _poly_loss_kernel,
        ignore_index=int(ignore_index),
        n_rows=N,
        n_classes=C,
    )

    partials = pl.pallas_call(
        kernel,
        out_shape=jax.ShapeDtypeStruct((n_partials, 8, 128), jnp.float32),
        grid=(n_partials, n_inner),
        in_specs=[
            pl.BlockSpec((tile_n, C), _row_block),   # logits streamed unpadded (native dtype)
            pl.BlockSpec((tile_n, 1), _row_block),   # target
            pl.BlockSpec((tile_n, 1), _row_block),   # weight[target]
        ],
        out_specs=pl.BlockSpec((1, 8, 128), lambda p, k: (p, 0, 0)),
        scratch_shapes=[pltpu.VMEM((tile_n, 1), jnp.float32),
                        pltpu.VMEM((tile_n, 1), jnp.float32)],
        compiler_params=pltpu.CompilerParams(
            dimension_semantics=("parallel", "arbitrary"),
            vmem_limit_bytes=vmem_limit,
        ),
    )(logits, tgt2, w_rows)

    ce_sum = jnp.sum(partials[:, 0, 0])
    pt_sum = jnp.sum(partials[:, 0, 1])
    n = jnp.float32(N)
    ce = ce_sum / (n + 1e-8)                     # CrossEntropyLoss: sum / (size + 1e-8)
    return ce + jnp.float32(epsilon) * (1.0 - pt_sum / n)   # reduction='mean'


def _poly_loss_ref(logits, target, weight, *, epsilon=1.0, ignore_index=-100):
    """Pure-JAX reference mirroring the PyTorch module (for verification)."""
    logits = logits.astype(jnp.float32)
    C = logits.shape[-1]
    onehot = jax.nn.one_hot(target, C, dtype=jnp.float32)
    logp = jax.nn.log_softmax(logits, axis=-1)
    p = jax.nn.softmax(logits, axis=-1)
    pt = jnp.sum(onehot * p, axis=-1)
    valid = (target != ignore_index).astype(jnp.float32)
    safe_t = jnp.clip(target, 0, C - 1)
    ce_i = -jnp.sum(onehot * logp, axis=-1) * weight.astype(jnp.float32)[safe_t] * valid
    ce = jnp.sum(ce_i) / (target.shape[0] + 1e-8)
    poly1 = ce + epsilon * (1.0 - pt)
    return jnp.mean(poly1)


if __name__ == "__main__":
    # batch=2, seq=30 flattened -> N=60 rows (NOT a multiple of the 16-row tile, so the
    # masked garbage tail of the last partial block is exercised), C=32 classes.
    B, S, C = 2, 30, 32
    N = B * S
    key = jax.random.PRNGKey(0)
    k_logits, k_target = jax.random.split(key)
    logits = jax.random.normal(k_logits, (N, C), dtype=jnp.float32)
    target = jax.random.randint(k_target, (N,), 0, C, dtype=jnp.int32)
    target = target.at[5].set(-100)   # exercise the ignore_index path
    # Deterministic per-class weights (PolyLoss.__init__ stores torch.tensor(weight)).
    weight = 0.5 + jnp.arange(C, dtype=jnp.float32) / C

    # tile_n=16 -> 4 row blocks -> grid (2 partials x 2 inner steps): exercises the
    # cross-tile accumulator, the 2-way partial combine and the partial-block row mask.
    out = poly_loss(logits, target, weight, epsilon=1.0, ignore_index=-100, tile_n=16)
    out = jax.block_until_ready(out)

    ref = _poly_loss_ref(logits, target, weight, epsilon=1.0, ignore_index=-100)
    assert jnp.allclose(out, ref, rtol=1e-5, atol=1e-5), (out, ref)
    print("KERNEL_OK")
</pallas_src>

<mosaic_0001>
module attributes {stable_mosaic.version = 11 : i64} {
  func.func @_poly_loss_kernel(%arg0: i32, %arg1: i32, %arg2: memref<16x32xf32, #tpu.memory_space<vmem>>, %arg3: memref<16x1xi32, #tpu.memory_space<vmem>>, %arg4: memref<16x1xf32, #tpu.memory_space<vmem>>, %arg5: memref<1x8x128xf32, #tpu.memory_space<vmem>>, %arg6: memref<16x1xf32, #tpu.memory_space<vmem>>, %arg7: memref<16x1xf32, #tpu.memory_space<vmem>>) attributes {dimension_semantics = [#tpu.dimension_semantics<parallel>, #tpu.dimension_semantics<arbitrary>], iteration_bounds = array<i64: 2, 2>, scalar_prefetch = 0 : i64, scratch_operands = 2 : i64, tpu.core_type = #tpu.core_type<tc>, window_params = [{transform_indices = @transform_0, window_bounds = array<i64: 16, 32>}, {transform_indices = @transform_1, window_bounds = array<i64: 16, 1>}, {transform_indices = @transform_2, window_bounds = array<i64: 16, 1>}, {transform_indices = @transform_3, window_bounds = array<i64: 1, 8, 128>}]} {
    %c0_i32 = arith.constant 0 : i32
    %0 = arith.cmpi eq, %arg1, %c0_i32 : i32
    %1 = arith.extui %0 : i1 to i32
    %c0_i32_0 = arith.constant 0 : i32
    %2 = arith.cmpi ne, %1, %c0_i32_0 : i32
    scf.if %2 {
      %cst_22 = arith.constant 0.000000e+00 : f32
      %61 = vector.broadcast %cst_22 : f32 to vector<16x1xf32>
      %c0_23 = arith.constant 0 : index
      %c0_24 = arith.constant 0 : index
      %62 = vector.load %arg6[%c0_23, %c0_24] : memref<16x1xf32, #tpu.memory_space<vmem>>, vector<16x1xf32>
      tpu.vector_store %arg6[%c0_23, %c0_24], %61 {strides = array<i32>} : memref<16x1xf32, #tpu.memory_space<vmem>>, vector<16x1xf32>,
      %cst_25 = arith.constant 0.000000e+00 : f32
      %63 = vector.broadcast %cst_25 : f32 to vector<16x1xf32>
      %c0_26 = arith.constant 0 : index
      %c0_27 = arith.constant 0 : index
      %64 = vector.load %arg7[%c0_26, %c0_27] : memref<16x1xf32, #tpu.memory_space<vmem>>, vector<16x1xf32>
      tpu.vector_store %arg7[%c0_26, %c0_27], %63 {strides = array<i32>} : memref<16x1xf32, #tpu.memory_space<vmem>>, vector<16x1xf32>,
    } else {
    }
    %c0 = arith.constant 0 : index
    %c0_1 = arith.constant 0 : index
    %3 = vector.load %arg2[%c0, %c0_1] : memref<16x32xf32, #tpu.memory_space<vmem>>, vector<16x32xf32>
    %c0_2 = arith.constant 0 : index
    %c0_3 = arith.constant 0 : index
    %4 = vector.load %arg3[%c0_2, %c0_3] : memref<16x1xi32, #tpu.memory_space<vmem>>, vector<16x1xi32>
    %c0_4 = arith.constant 0 : index
    %c0_5 = arith.constant 0 : index
    %5 = vector.load %arg4[%c0_4, %c0_5] : memref<16x1xf32, #tpu.memory_space<vmem>>, vector<16x1xf32>
    %c2_i32 = arith.constant 2 : i32
    %6 = arith.muli %arg0, %c2_i32 : i32
    %7 = arith.addi %6, %arg1 : i32
    %c16_i32 = arith.constant 16 : i32
    %8 = arith.muli %7, %c16_i32 : i32
    %9 = tpu.iota {dimensions = array<i32: 0>} : vector<16x1xi32>
    %10 = vector.broadcast %8 : i32 to vector<16x1xi32>
    %11 = arith.addi %10, %9 : vector<16x1xi32>
    %c60_i32 = arith.constant 60 : i32
    %12 = vector.broadcast %c60_i32 : i32 to vector<16x1xi32>
    %13 = arith.cmpi slt, %11, %12 : vector<16x1xi32>
    %14 = tpu.iota {dimensions = array<i32: 1>} : vector<1x32xi32>
    %15 = vector.broadcast %14 : vector<1x32xi32> to vector<16x32xi32>
    %16 = vector.broadcast %4 : vector<16x1xi32> to vector<16x32xi32>
    %17 = arith.cmpi eq, %15, %16 : vector<16x32xi32>
    %cst = arith.constant 0.000000e+00 : f32
    %18 = vector.broadcast %cst : f32 to vector<16x32xf32>
    %19 = arith.select %17, %3, %18 : vector<16x32xi1>, vector<16x32xf32>
    %cst_6 = arith.constant dense<0.000000e+00> : vector<16xf32>
    %20 = vector.multi_reduction <add>, %19, %cst_6 [1] : vector<16x32xf32> to vector<16xf32>
    %21 = vector.shape_cast %20 : vector<16xf32> to vector<16x1xf32>
    %cst_7 = arith.constant dense<0xFF800000> : vector<16xf32>
    %22 = vector.multi_reduction <maximumf>, %3, %cst_7 [1] : vector<16x32xf32> to vector<16xf32>
    %23 = vector.shape_cast %22 : vector<16xf32> to vector<16x1xf32>
    %24 = vector.broadcast %23 : vector<16x1xf32> to vector<16x32xf32>
    %25 = arith.subf %3, %24 : vector<16x32xf32>
    %26 = math.exp %25 : vector<16x32xf32>
    %cst_8 = arith.constant dense<0.000000e+00> : vector<16xf32>
    %27 = vector.multi_reduction <add>, %26, %cst_8 [1] : vector<16x32xf32> to vector<16xf32>
    %28 = vector.shape_cast %27 : vector<16xf32> to vector<16x1xf32>
    %29 = tpu.reciprocal %28 : vector<16x1xf32> -> vector<16x1xf32>
    %c0_i32_9 = arith.constant 0 : i32
    %30 = vector.broadcast %c0_i32_9 : i32 to vector<16x1xi32>
    %31 = arith.cmpi sge, %4, %30 : vector<16x1xi32>
    %c32_i32 = arith.constant 32 : i32
    %32 = vector.broadcast %c32_i32 : i32 to vector<16x1xi32>
    %33 = arith.cmpi slt, %4, %32 : vector<16x1xi32>
    %34 = arith.andi %31, %33 : vector<16x1xi1>
    %c-100_i32 = arith.constant -100 : i32
    %35 = vector.broadcast %c-100_i32 : i32 to vector<16x1xi32>
    %36 = arith.cmpi ne, %4, %35 : vector<16x1xi32>
    %37 = arith.andi %34, %13 : vector<16x1xi1>
    %38 = arith.andi %37, %36 : vector<16x1xi1>
    %39 = arith.subf %21, %23 : vector<16x1xf32>
    %40 = math.exp %39 : vector<16x1xf32>
    %41 = arith.mulf %40, %29 : vector<16x1xf32>
    %cst_10 = arith.constant 0.000000e+00 : f32
    %42 = vector.broadcast %cst_10 : f32 to vector<16x1xf32>
    %43 = arith.select %37, %41, %42 : vector<16x1xi1>, vector<16x1xf32>
    %44 = arith.subf %21, %23 : vector<16x1xf32>
    %45 = math.log %28 : vector<16x1xf32>
    %46 = arith.subf %44, %45 : vector<16x1xf32>
    %cst_11 = arith.constant 0.000000e+00 : f32
    %47 = vector.broadcast %cst_11 : f32 to vector<16x1xf32>
    %48 = arith.subf %47, %46 : vector<16x1xf32>
    %49 = arith.mulf %48, %5 : vector<16x1xf32>
    %cst_12 = arith.constant 0.000000e+00 : f32
    %50 = vector.broadcast %cst_12 : f32 to vector<16x1xf32>
    %51 = arith.select %38, %49, %50 : vector<16x1xi1>, vector<16x1xf32>
    %c0_13 = arith.constant 0 : index
    %c0_14 = arith.constant 0 : index
    %52 = vector.load %arg6[%c0_13, %c0_14] : memref<16x1xf32, #tpu.memory_space<vmem>>, vector<16x1xf32>
    %53 = arith.addf %52, %51 : vector<16x1xf32>
    %c0_15 = arith.constant 0 : index
    %c0_16 = arith.constant 0 : index
    %54 = vector.load %arg6[%c0_15, %c0_16] : memref<16x1xf32, #tpu.memory_space<vmem>>, vector<16x1xf32>
    tpu.vector_store %arg6[%c0_15, %c0_16], %53 {strides = array<i32>} : memref<16x1xf32, #tpu.memory_space<vmem>>, vector<16x1xf32>,
    %c0_17 = arith.constant 0 : index
    %c0_18 = arith.constant 0 : index
    %55 = vector.load %arg7[%c0_17, %c0_18] : memref<16x1xf32, #tpu.memory_space<vmem>>, vector<16x1xf32>
    %56 = arith.addf %55, %43 : vector<16x1xf32>
    %c0_19 = arith.constant 0 : index
    %c0_20 = arith.constant 0 : index
    %57 = vector.load %arg7[%c0_19, %c0_20] : memref<16x1xf32, #tpu.memory_space<vmem>>, vector<16x1xf32>
    tpu.vector_store %arg7[%c0_19, %c0_20], %56 {strides = array<i32>} : memref<16x1xf32, #tpu.memory_space<vmem>>, vector<16x1xf32>,
    %c1_i32 = arith.constant 1 : i32
    %58 = arith.cmpi eq, %arg1, %c1_i32 : i32
    %59 = arith.extui %58 : i1 to i32
    %c0_i32_21 = arith.constant 0 : i32
    %60 = arith.cmpi ne, %59, %c0_i32_21 : i32
    scf.if %60 {
      %c0_22 = arith.constant 0 : index
      %c0_23 = arith.constant 0 : index
      %61 = vector.load %arg6[%c0_22, %c0_23] : memref<16x1xf32, #tpu.memory_space<vmem>>, vector<16x1xf32>
      %62 = vector.shape_cast %61 : vector<16x1xf32> to vector<1x16x1xf32>
      %cst_24 = arith.constant dense<0.000000e+00> : vector<1xf32>
      %63 = vector.multi_reduction <add>, %62, %cst_24 [1, 2] : vector<1x16x1xf32> to vector<1xf32>
      %64 = vector.shape_cast %63 : vector<1xf32> to vector<1x1x1xf32>
      %65 = vector.extract %64[0, 0, 0] : f32 from vector<1x1x1xf32>
      %c0_25 = arith.constant 0 : index
      %c0_26 = arith.constant 0 : index
      %66 = vector.load %arg7[%c0_25, %c0_26] : memref<16x1xf32, #tpu.memory_space<vmem>>, vector<16x1xf32>
      %67 = vector.shape_cast %66 : vector<16x1xf32> to vector<1x16x1xf32>
      %cst_27 = arith.constant dense<0.000000e+00> : vector<1xf32>
      %68 = vector.multi_reduction <add>, %67, %cst_27 [1, 2] : vector<1x16x1xf32> to vector<1xf32>
      %69 = vector.shape_cast %68 : vector<1xf32> to vector<1x1x1xf32>
      %70 = vector.extract %69[0, 0, 0] : f32 from vector<1x1x1xf32>
      %71 = tpu.iota {dimensions = array<i32: 2>} : vector<1x8x128xi32>
      %c0_i32_28 = arith.constant 0 : i32
      %72 = vector.broadcast %c0_i32_28 : i32 to vector<1x8x128xi32>
      %73 = arith.cmpi eq, %71, %72 : vector<1x8x128xi32>
      %c1_i32_29 = arith.constant 1 : i32
      %74 = vector.broadcast %c1_i32_29 : i32 to vector<1x8x128xi32>
      %75 = arith.cmpi eq, %71, %74 : vector<1x8x128xi32>
      %cst_30 = arith.constant 0.000000e+00 : f32
      %76 = vector.broadcast %70 : f32 to vector<1x8x128xf32>
      %77 = vector.broadcast %cst_30 : f32 to vector<1x8x128xf32>
      %78 = arith.select %75, %76, %77 : vector<1x8x128xi1>, vector<1x8x128xf32>
      %79 = vector.broadcast %65 : f32 to vector<1x8x128xf32>
      %80 = arith.select %73, %79, %78 : vector<1x8x128xi1>, vector<1x8x128xf32>
      %c0_31 = arith.constant 0 : index
      %c0_32 = arith.constant 0 : index
      %c0_33 = arith.constant 0 : index
      %81 = vector.load %arg5[%c0_31, %c0_32, %c0_33] : memref<1x8x128xf32, #tpu.memory_space<vmem>>, vector<1x8x128xf32>
      tpu.vector_store %arg5[%c0_31, %c0_32, %c0_33], %80 {strides = array<i32>} : memref<1x8x128xf32, #tpu.memory_space<vmem>>, vector<1x8x128xf32>,
    } else {
    }
    return
  }
  func.func @transform_0(%arg0: i32, %arg1: i32) -> (i32, i32) {
    %c2_i32 = arith.constant 2 : i32
    %0 = arith.muli %arg0, %c2_i32 : i32
    %1 = arith.addi %0, %arg1 : i32
    %c3_i32 = arith.constant 3 : i32
    %2 = arith.minsi %1, %c3_i32 : i32
    %c0_i32 = arith.constant 0 : i32
    %c0_i32_0 = arith.constant 0 : i32
    return %2, %c0_i32 : i32, i32
  }
  func.func @transform_1(%arg0: i32, %arg1: i32) -> (i32, i32) {
    %c2_i32 = arith.constant 2 : i32
    %0 = arith.muli %arg0, %c2_i32 : i32
    %1 = arith.addi %0, %arg1 : i32
    %c3_i32 = arith.constant 3 : i32
    %2 = arith.minsi %1, %c3_i32 : i32
    %c0_i32 = arith.constant 0 : i32
    %c0_i32_0 = arith.constant 0 : i32
    return %2, %c0_i32 : i32, i32
  }
  func.func @transform_2(%arg0: i32, %arg1: i32) -> (i32, i32) {
    %c2_i32 = arith.constant 2 : i32
    %0 = arith.muli %arg0, %c2_i32 : i32
    %1 = arith.addi %0, %arg1 : i32
    %c3_i32 = arith.constant 3 : i32
    %2 = arith.minsi %1, %c3_i32 : i32
    %c0_i32 = arith.constant 0 : i32
    %c0_i32_0 = arith.constant 0 : i32
    return %2, %c0_i32 : i32, i32
  }
  func.func @transform_3(%arg0: i32, %arg1: i32) -> (i32, i32, i32) {
    %c0_i32 = arith.constant 0 : i32
    %c0_i32_0 = arith.constant 0 : i32
    %c0_i32_1 = arith.constant 0 : i32
    return %arg0, %c0_i32, %c0_i32_0 : i32, i32, i32
  }
}

</mosaic_0001>

<llo_original>
// kernel: tpu_custom_call.1
$region0: #{tpu_custom_call.1}
  #allocation0 [shape = 'u32[]', space=smem, size = 0x4, offset = 0x4, fixed_abs, tag = 'smem constant byte address 0x4 - core index']
  #allocation1 [shape = 'u32[144,128]{1,0:T(1,128)}', space=vmem, size = 0x12000, scoped, tag = 'internal scratch']
  #allocation2 [shape = 'f32[16,1]{1,0:T(8,128)}', space=vmem, size = 0x2000, scoped, tag = 'scratch operand']
  #allocation3 [shape = 'f32[16,1]{1,0:T(8,128)}', space=vmem, size = 0x2000, scoped, tag = 'scratch operand']
  %s0 = inlined_call_operand.vmem [shape: f32[60,32], index: 0, kind: input, shape index: {}]
  %s1 = inlined_call_operand.vmem [shape: s32[60,1], index: 1, kind: input, shape index: {}]
  %s2 = inlined_call_operand.vmem [shape: f32[60,1], index: 2, kind: input, shape index: {}]
  %s3 = inlined_call_operand.hbm [shape: f32[2,8,128], index: 3, kind: output, shape index: {}]
  %s4 = sld [smem:[#allocation0]]
  $region53: #{tpu_custom_call.1} parent=0
    _
  %s6 = ssub.s32 1, %s4
  %s7 = scalar_select 0, %s6, %s4
  $region1: #{tpu_custom_call.1} parent=0
    #allocation4 [shape = 'u8[8192]{0}', space=vmem, size = 0x2000, scoped, tag = 'output window, operand 0']
    #allocation5 [shape = 's32[2]{0}', space=sflag, size = 0x8, scoped, tag = 'scoped memory for tpu_custom_call.1']
    %8 = vsyncpa [#allocation5], 0
    %s9 = scalar_lea.sflag [#allocation5], 1
    %10 = vsyncpa %s9, 0
    loop: start=0, step=1, limit=6
    $region2: #{tpu_custom_call.1} parent=1 // loop_pre_header
      _
    $region3: #{tpu_custom_call.1} parent=1 // loop_header
      %s12 = sphi 0, %s16
      %p13 = scmp.ge.s32.totalorder %s12, 6
      %s19 = sphi 0, %s31
      %s20 = sphi 0, %s27
      %s21 = sphi 0, %s19
      %s22 = sphi 0, %s20
      %s23 = sphi 0, %s21
      %s24 = sphi 0, %s22
      %s42 = sphi 0, %s44
      %s45 = sphi 0, %s42
      %s46 = sphi 0, %s45
      %s62 = sphi 0, %s46
      %s76 = sphi 0, %s78
      %s79 = sphi 0, %s76
      %s80 = sphi 0, %s79
      %s96 = sphi 0, %s80
      %s110 = sphi 0, %s112
      %s113 = sphi 0, %s110
      %s114 = sphi 0, %s113
      %s130 = sphi 0, %s114
      %s136 = sphi 0, %s138
      %s139 = sphi 0, %s136
      %s140 = sphi 0, %s139
      %s156 = sphi 0, %s140
    $region4: #{tpu_custom_call.1} parent=1 // loop_header_branch
      %15 = sbr.rel (%p13) target = $region8
    $region5: #{tpu_custom_call.1} parent=1 // loop_body
      %s17 = ssub.s32 %s12, 1
      %s18 = ssub.s32 %s12, 2
      %s25 = sadd.s32 1, %s20
      %p26 = scmp.ge.s32.totalorder %s25, 2
      %s27 = scalar_select %p26, 0, %s25
      %s28 = sadd.s32 1, %s19
      %s29 = scalar_select %p26, %s28, %s19
      %p30 = scmp.ge.s32.totalorder %s29, 2
      %s31 = scalar_select %p30, 0, %s29
      %s32 = smul.u32 %s19, 2
      %s33 = sadd.s32 %s32, %s20
      %p34 = scmp.lt.s32.totalorder %s33, 3
      %s35 = scalar_select %p34, %s33, 3
      %s36 = smul.u32 %s31, 2
      %s37 = sadd.s32 %s36, %s27
      %p38 = scmp.lt.s32.totalorder %s37, 3
      %s39 = scalar_select %p38, %s37, 3
      %s40 = ssub.s32 %s35, %s39
      %p41 = scmp.eq.s32.totalorder %s40, 0
      %s43 = sadd.s32 %s42, 1
      %s44 = scalar_select %p41, %s42, %s43
      %p47 = pneg %p41
      %p48 = scmp.eq.s32.totalorder %s12, 3
      %p49 = por %p47, %p48
      %p50 = scmp.ne.s32.totalorder %s42, %s45
      %p51 = scmp.eq.s32.totalorder %s12, 0
      %p52 = por %p50, %p51
      %p53 = scmp.ne.s32.totalorder %s42, %s45
      %p54 = scmp.eq.s32.totalorder %s17, 3
      %p55 = por %p53, %p54
      %p56 = scmp.ne.s32.totalorder %s45, %s46
      %p57 = scmp.eq.s32.totalorder %s17, 0
      %p58 = por %p56, %p57
      %p59 = scmp.ne.s32.totalorder %s45, %s46
      %p60 = scmp.eq.s32.totalorder %s18, 3
      %p61 = por %p59, %p60
      %p63 = scmp.ne.s32.totalorder %s46, %s62
      %p64 = scmp.eq.s32.totalorder %s18, 0
      %p65 = por %p63, %p64
      %s66 = smul.u32 %s19, 2
      %s67 = sadd.s32 %s66, %s20
      %p68 = scmp.lt.s32.totalorder %s67, 3
      %s69 = scalar_select %p68, %s67, 3
      %s70 = smul.u32 %s31, 2
      %s71 = sadd.s32 %s70, %s27
      %p72 = scmp.lt.s32.totalorder %s71, 3
      %s73 = scalar_select %p72, %s71, 3
      %s74 = ssub.s32 %s69, %s73
      %p75 = scmp.eq.s32.totalorder %s74, 0
      %s77 = sadd.s32 %s76, 1
      %s78 = scalar_select %p75, %s76, %s77
      %p81 = pneg %p75
      %p82 = scmp.eq.s32.totalorder %s12, 3
      %p83 = por %p81, %p82
      %p84 = scmp.ne.s32.totalorder %s76, %s79
      %p85 = scmp.eq.s32.totalorder %s12, 0
      %p86 = por %p84, %p85
      %p87 = scmp.ne.s32.totalorder %s76, %s79
      %p88 = scmp.eq.s32.totalorder %s17, 3
      %p89 = por %p87, %p88
      %p90 = scmp.ne.s32.totalorder %s79, %s80
      %p91 = scmp.eq.s32.totalorder %s17, 0
      %p92 = por %p90, %p91
      %p93 = scmp.ne.s32.totalorder %s79, %s80
      %p94 = scmp.eq.s32.totalorder %s18, 3
      %p95 = por %p93, %p94
      %p97 = scmp.ne.s32.totalorder %s80, %s96
      %p98 = scmp.eq.s32.totalorder %s18, 0
      %p99 = por %p97, %p98
      %s100 = smul.u32 %s19, 2
      %s101 = sadd.s32 %s100, %s20
      %p102 = scmp.lt.s32.totalorder %s101, 3
      %s103 = scalar_select %p102, %s101, 3
      %s104 = smul.u32 %s31, 2
      %s105 = sadd.s32 %s104, %s27
      %p106 = scmp.lt.s32.totalorder %s105, 3
      %s107 = scalar_select %p106, %s105, 3
      %s108 = ssub.s32 %s103, %s107
      %p109 = scmp.eq.s32.totalorder %s108, 0
      %s111 = sadd.s32 %s110, 1
      %s112 = scalar_select %p109, %s110, %s111
      %p115 = pneg %p109
      %p116 = scmp.eq.s32.totalorder %s12, 3
      %p117 = por %p115, %p116
      %p118 = scmp.ne.s32.totalorder %s110, %s113
      %p119 = scmp.eq.s32.totalorder %s12, 0
      %p120 = por %p118, %p119
      %p121 = scmp.ne.s32.totalorder %s110, %s113
      %p122 = scmp.eq.s32.totalorder %s17, 3
      %p123 = por %p121, %p122
      %p124 = scmp.ne.s32.totalorder %s113, %s114
      %p125 = scmp.eq.s32.totalorder %s17, 0
      %p126 = por %p124, %p125
      %p127 = scmp.ne.s32.totalorder %s113, %s114
      %p128 = scmp.eq.s32.totalorder %s18, 3
      %p129 = por %p127, %p128
      %p131 = scmp.ne.s32.totalorder %s114, %s130
      %p132 = scmp.eq.s32.totalorder %s18, 0
      %p133 = por %p131, %p132
      %s134 = ssub.s32 %s19, %s31
      %p135 = scmp.eq.s32.totalorder %s134, 0
      %s137 = sadd.s32 %s136, 1
      %s138 = scalar_select %p135, %s136, %s137
      %p141 = pneg %p135
      %p142 = scmp.eq.s32.totalorder %s12, 3
      %p143 = por %p141, %p142
      %p144 = scmp.ne.s32.totalorder %s136, %s139
      %p145 = scmp.eq.s32.totalorder %s12, 0
      %p146 = por %p144, %p145
      %p147 = scmp.ne.s32.totalorder %s136, %s139
      %p148 = scmp.eq.s32.totalorder %s17, 3
      %p149 = por %p147, %p148
      %p150 = scmp.ne.s32.totalorder %s139, %s140
      %p151 = scmp.eq.s32.totalorder %s17, 0
      %p152 = por %p150, %p151
      %p153 = scmp.ne.s32.totalorder %s139, %s140
      %p154 = scmp.eq.s32.totalorder %s18, 3
      %p155 = por %p153, %p154
      %p157 = scmp.ne.s32.totalorder %s140, %s156
      %p158 = scmp.eq.s32.totalorder %s18, 0
      %p159 = por %p157, %p158
      %p160 = scmp.le.s32.totalorder 1, %s12
      %p161 = scmp.lt.s32.totalorder %s12, 5
      %p162 = pnand %p160, %p161
      %p163 = pneg %p162
      // Predicated region
      $region9: #{tpu_custom_call.1} parent=5 // pred_check
        _
      $region10: #{tpu_custom_call.1} parent=5 // pred_check_branch
        %165 = sbr.rel (%p162) target = $region12
      $region11: #{tpu_custom_call.1} parent=5 // pred_region
        %s166 = ssub.s32 %s12, 1
      $region12: #{tpu_custom_call.1} parent=5 // pred_fallthru
        _
      %p167 = scmp.lt.s32.totalorder %s12, 4
      // Predicated region
      $region13: #{tpu_custom_call.1} parent=5 // pred_check
        %p168 = pneg %p167
      $region14: #{tpu_custom_call.1} parent=5 // pred_check_branch
        %170 = sbr.rel (%p168) target = $region16
      $region15: #{tpu_custom_call.1} parent=5 // pred_region
        // Predicated region
        $region17: #{tpu_custom_call.1} parent=15 // pred_check
          %p171 = pneg %p52
        $region18: #{tpu_custom_call.1} parent=15 // pred_check_branch
          %173 = sbr.rel (%p171) target = $region20
        $region19: #{tpu_custom_call.1} parent=15 // pred_region
          %s174 = smul.u32 %s19, 2
          %s175 = sadd.s32 %s174, %s20
          %p176 = scmp.lt.s32.totalorder %s175, 3
          %s177 = scalar_select %p176, %s175, 3
          %s178 = smul.u32 2, %s177
          %p179 = scmp.lt.s32.totalorder %s178, 7
          %s180 = scalar_select %p179, %s178, 7
          %s181 = smul.addr %s180, 8
          %s182 = scalar_lea.vmem %s0, %s181
          %s183 = smul.u32 %s19, 2
          %s184 = sadd.s32 %s183, %s20
          %p185 = scmp.lt.s32.totalorder %s184, 3
          %s186 = scalar_select %p185, %s184, 3
          %s187 = smul.u32 2, %s186
        $region20: #{tpu_custom_call.1} parent=15 // pred_fallthru
          _
        // Predicated region
        $region21: #{tpu_custom_call.1} parent=15 // pred_check
          %p188 = pneg %p86
        $region22: #{tpu_custom_call.1} parent=15 // pred_check_branch
          %190 = sbr.rel (%p188) target = $region24
        $region23: #{tpu_custom_call.1} parent=15 // pred_region
          %s191 = smul.u32 %s19, 2
          %s192 = sadd.s32 %s191, %s20
          %p193 = scmp.lt.s32.totalorder %s192, 3
          %s194 = scalar_select %p193, %s192, 3
          %s195 = smul.u32 2, %s194
          %p196 = scmp.lt.s32.totalorder %s195, 7
          %s197 = scalar_select %p196, %s195, 7
          %s198 = smul.addr %s197, 8
          %s199 = scalar_lea.vmem %s1, %s198
          %s200 = smul.u32 %s19, 2
          %s201 = sadd.s32 %s200, %s20
          %p202 = scmp.lt.s32.totalorder %s201, 3
          %s203 = scalar_select %p202, %s201, 3
          %s204 = smul.u32 2, %s203
        $region24: #{tpu_custom_call.1} parent=15 // pred_fallthru
          _
        // Predicated region
        $region25: #{tpu_custom_call.1} parent=15 // pred_check
          %p205 = pneg %p120
        $region26: #{tpu_custom_call.1} parent=15 // pred_check_branch
          %207 = sbr.rel (%p205) target = $region28
        $region27: #{tpu_custom_call.1} parent=15 // pred_region
          %s208 = smul.u32 %s19, 2
          %s209 = sadd.s32 %s208, %s20
          %p210 = scmp.lt.s32.totalorder %s209, 3
          %s211 = scalar_select %p210, %s209, 3
          %s212 = smul.u32 2, %s211
          %p213 = scmp.lt.s32.totalorder %s212, 7
          %s214 = scalar_select %p213, %s212, 7
          %s215 = smul.addr %s214, 8
          %s216 = scalar_lea.vmem %s2, %s215
          %s217 = smul.u32 %s19, 2
          %s218 = sadd.s32 %s217, %s20
          %p219 = scmp.lt.s32.totalorder %s218, 3
          %s220 = scalar_select %p219, %s218, 3
          %s221 = smul.u32 2, %s220
        $region28: #{tpu_custom_call.1} parent=15 // pred_fallthru
          _
      $region16: #{tpu_custom_call.1} parent=5 // pred_fallthru
        _
      %p222 = scmp.le.s32.totalorder 1, %s12
      %p223 = scmp.lt.s32.totalorder %s12, 5
      %p224 = pnand %p222, %p223
      %p225 = pneg %p224
      // Predicated region
      $region29: #{tpu_custom_call.1} parent=5 // pred_check
        _
      $region30: #{tpu_custom_call.1} parent=5 // pred_check_branch
        %227 = sbr.rel (%p224) target = $region32
      $region31: #{tpu_custom_call.1} parent=5 // pred_region
        %s228 = ssub.s32 %s12, 1
        %s229 = smul.u32 %s21, 2
        %s230 = sadd.s32 %s229, %s22
        %p231 = scmp.lt.s32.totalorder %s230, 3
        %s232 = scalar_select %p231, %s230, 3
        %s233 = smul.u32 2, %s232
        %p234 = scmp.lt.s32.totalorder %s233, 7
        %s235 = scalar_select %p234, %s233, 7
        %s236 = smul.addr %s235, 8
        %s237 = scalar_lea.vmem %s0, %s236
        %p238 = pneg %p58
        %p239 = pneg %p55
        %s240 = smul.u32 %s21, 2
        %s241 = sadd.s32 %s240, %s22
        %p242 = scmp.lt.s32.totalorder %s241, 3
        %s243 = scalar_select %p242, %s241, 3
        %s244 = smul.u32 2, %s243
        %p245 = scmp.lt.s32.totalorder %s244, 7
        %s246 = scalar_select %p245, %s244, 7
        %s247 = smul.addr %s246, 8
        %s248 = scalar_lea.vmem %s1, %s247
        %p249 = pneg %p92
        %p250 = pneg %p89
        %s251 = smul.u32 %s21, 2
        %s252 = sadd.s32 %s251, %s22
        %p253 = scmp.lt.s32.totalorder %s252, 3
        %s254 = scalar_select %p253, %s252, 3
        %s255 = smul.u32 2, %s254
        %p256 = scmp.lt.s32.totalorder %s255, 7
        %s257 = scalar_select %p256, %s255, 7
        %s258 = smul.addr %s257, 8
        %s259 = scalar_lea.vmem %s2, %s258
        %p260 = pneg %p126
        %p261 = pneg %p123
        %p262 = pneg %p152
        %p263 = pneg %p149
        %s264 = sand.u32 %s139, 1
        %s265 = scalar_lea.sflag [#allocation5], %s264
        %s266 = sand.u32 %s139, 1
        %s267 = smul.addr %s266, 8
        %s268 = scalar_lea.vmem [#allocation4], %s267
        %s269 = smul.u32 %s21, 2
        %s270 = sadd.s32 %s269, %s22
        %p271 = scmp.lt.s32.totalorder %s270, 3
        %s272 = scalar_select %p271, %s270, 3
        %s273 = smul.u32 2, %s272
        %p274 = scmp.lt.s32.totalorder %s273, 7
        %s275 = scalar_select %p274, %s273, 7
        %s276 = smul.addr %s275, 8
        %s277 = scalar_lea.vmem %s0, %s276
        %s278 = smul.u32 %s21, 2
        %s279 = sadd.s32 %s278, %s22
        %p280 = scmp.lt.s32.totalorder %s279, 3
        %s281 = scalar_select %p280, %s279, 3
        %s282 = smul.u32 2, %s281
        %s283 = smul.u32 %s21, 2
        %s284 = sadd.s32 %s283, %s22
        %p285 = scmp.lt.s32.totalorder %s284, 3
        %s286 = scalar_select %p285, %s284, 3
        %s287 = smul.u32 2, %s286
        %p288 = scmp.lt.s32.totalorder %s287, 7
        %s289 = scalar_select %p288, %s287, 7
        %s290 = smul.addr %s289, 8
        %s291 = scalar_lea.vmem %s1, %s290
        %s292 = smul.u32 %s21, 2
        %s293 = sadd.s32 %s292, %s22
        %p294 = scmp.lt.s32.totalorder %s293, 3
        %s295 = scalar_select %p294, %s293, 3
        %s296 = smul.u32 2, %s295
        %s297 = smul.u32 %s21, 2
        %s298 = sadd.s32 %s297, %s22
        %p299 = scmp.lt.s32.totalorder %s298, 3
        %s300 = scalar_select %p299, %s298, 3
        %s301 = smul.u32 2, %s300
        %p302 = scmp.lt.s32.totalorder %s301, 7
        %s303 = scalar_select %p302, %s301, 7
        %s304 = smul.addr %s303, 8
        %s305 = scalar_lea.vmem %s2, %s304
        %s306 = smul.u32 %s21, 2
        %s307 = sadd.s32 %s306, %s22
        %p308 = scmp.lt.s32.totalorder %s307, 3
        %s309 = scalar_select %p308, %s307, 3
        %s310 = smul.u32 2, %s309
        %p311 = scmp.eq.s32.totalorder %s22, 0
        // Predicated region
        $region33: #{tpu_custom_call.1} parent=31 // pred_check
          %p312 = pneg %p311
        $region34: #{tpu_custom_call.1} parent=31 // pred_check_branch
          %314 = sbr.rel (%p312) target = $region36
        $region35: #{tpu_custom_call.1} parent=31 // pred_region
          %vm315 = vcmask 7168
          %316 = vst.msk [vmem:[#allocation2] sm:$0xff] %vm315, 0.0
          %317 = vst.msk [vmem:[#allocation2 + $0x8] sm:$0xff] %vm315, 0.0
          %318 = vst.msk [vmem:[#allocation3] sm:$0xff] %vm315, 0.0
          %319 = vst.msk [vmem:[#allocation3 + $0x8] sm:$0xff] %vm315, 0.0
        $region36: #{tpu_custom_call.1} parent=31 // pred_fallthru
          _
        %v320 = vld [vmem:[%s277] sm:$0xff]
        %v321 = vld [vmem:[%s277 + $0x8] sm:$0xff]
        %v322 = vld [vmem:[%s291] sm:$0xff]
        %v323 = vld [vmem:[%s291 + $0x8] sm:$0xff]
        %v324 = vld [vmem:[%s305] sm:$0xff]
        %v325 = vld [vmem:[%s305 + $0x8] sm:$0xff]
        %s326 = smul.u32 %s21, 2
        %s327 = sadd.s32 %s326, %s22
        %s328 = smul.u32 %s327, 16
        %v329 = vlaneseq
        %v330 = vshrl.u32 %v329, 7
        %v331 = vadd.s32 %v330, 8
        %v332 = vstv %s328
        %v333 = vadd.s32 %v332, %v330
        %v334 = vadd.s32 %v332, %v331
        %vm335 = vcmp.lt.s32.totalorder %v333, 60
        %vm336 = vcmp.lt.s32.totalorder %v334, 60
        %v337 = vlaneseq
        %v338 = vand.u32 %v337, 127
        %339 = vset.pattern.permute.xlu0 0
        %340 = vperm.xlu0 %339, %v322
        %v341 = vpop.permute.xlu0 %340
        %342 = vset.pattern.permute.xlu0 0
        %343 = vperm.xlu0 %342, %v323
        %v344 = vpop.permute.xlu0 %343
        %vm345 = vcmp.eq.s32.totalorder %v338, %v341
        %vm346 = vcmp.eq.s32.totalorder %v338, %v344
        %v347 = vsel %vm345, %v320, 0.0
        %v348 = vsel %vm346, %v321, 0.0
        %vm349 = vcmask 261120
        %v350 = vsel %vm349, %v347, 0.0
        %351 = vadd.xlane.f32.xlu0 %v350
        %v352 = vpop.xlane.xlu0 %351
        %v353 = vsel %vm349, %v348, 0.0
        %354 = vadd.xlane.f32.xlu0 %v353
        %v355 = vpop.xlane.xlu0 %354
        %v356 = vsel %vm349, %v320, -inf
        %357 = vmax.xlane.f32.xlu0 %v356
        %v358 = vpop.xlane.xlu0 %357
        %v359 = vsel %vm349, %v321, -inf
        %360 = vmax.xlane.f32.xlu0 %v359
        %v361 = vpop.xlane.xlu0 %360
        %v362 = vsub.f32 %v320, %v358
        %v363 = vsub.f32 %v321, %v361
        %v364 = vmul.f32 %v362, 1.442695
        %v365 = vpow.pop %v364
        %v366 = vmul.f32 %v363, 1.442695
        %v367 = vpow.pop %v366
        %v368 = vsel %vm349, %v365, 0.0
        %369 = vadd.xlane.f32.xlu0 %v368
        %v370 = vpop.xlane.xlu0 %369
        %v371 = vsel %vm349, %v367, 0.0
        %372 = vadd.xlane.f32.xlu0 %v371
        %v373 = vpop.xlane.xlu0 %372
        %v374 = vrcp.pop %v370
        %v375 = vrcp.pop %v373
        %vm376 = vcmp.ge.s32.totalorder %v322, 0
        %vm377 = vcmp.ge.s32.totalorder %v323, 0
        %vm378 = vcmp.lt.s32.totalorder %v322, 32
        %vm379 = vcmp.lt.s32.totalorder %v323, 32
        %vm380 = vmand %vm376, %vm378
        %vm381 = vmand %vm377, %vm379
        %vm382 = vcmp.ne.s32.totalorder %v322, 4294967196
        %vm383 = vcmp.ne.s32.totalorder %v323, 4294967196
        %vm384 = vmand %vm380, %vm335
        %vm385 = vmand %vm381, %vm336
        %vm386 = vmand %vm384, %vm382
        %vm387 = vmand %vm385, %vm383
        %v388 = vsub.f32 %v352, %v358
        %v389 = vsub.f32 %v355, %v361
        %v390 = vmul.f32 %v388, 1.442695
        %v391 = vpow.pop %v390
        %v392 = vmul.f32 %v389, 1.442695
        %v393 = vpow.pop %v392
        %v394 = vmul.f32 %v391, %v374
        %v395 = vmul.f32 %v393, %v375
        %v396 = vsel %vm384, %v394, 0.0
        %v397 = vsel %vm385, %v395, 0.0
        %v398 = vlog2.pop %v370
        %v399 = vmul.f32 %v398, 0.6931472
        %v400 = vlog2.pop %v373
        %v401 = vmul.f32 %v400, 0.6931472
        %v402 = vsub.f32 %v388, %v399
        %v403 = vsub.f32 %v389, %v401
        %v404 = vsub.f32 0.0, %v402
        %v405 = vsub.f32 0.0, %v403
        %v406 = vmul.f32 %v404, %v324
        %v407 = vmul.f32 %v405, %v325
        %v408 = vsel %vm386, %v406, 0.0
        %v409 = vsel %vm387, %v407, 0.0
        %v410 = vld [vmem:[#allocation2] sm:$0xff]
        %v411 = vld [vmem:[#allocation2 + $0x8] sm:$0xff]
        %v412 = vadd.f32 %v410, %v408
        %v413 = vadd.f32 %v411, %v409
        %vm414 = vcmask 7168
        %415 = vst.msk [vmem:[#allocation2] sm:$0xff] %vm414, %v412
        %416 = vst.msk [vmem:[#allocation2 + $0x8] sm:$0xff] %vm414, %v413
        %v417 = vld [vmem:[#allocation3] sm:$0xff]
        %v418 = vld [vmem:[#allocation3 + $0x8] sm:$0xff]
        %v419 = vadd.f32 %v417, %v396
        %v420 = vadd.f32 %v418, %v397
        %421 = vst.msk [vmem:[#allocation3] sm:$0xff] %vm414, %v419
        %422 = vst.msk [vmem:[#allocation3 + $0x8] sm:$0xff] %vm414, %v420
        %p423 = scmp.eq.s32.totalorder %s22, 1
        // Predicated region
        $region37: #{tpu_custom_call.1} parent=31 // pred_check
          %p424 = pneg %p423
        $region38: #{tpu_custom_call.1} parent=31 // pred_check_branch
          %426 = sbr.rel (%p424) target = $region40
        $region39: #{tpu_custom_call.1} parent=31 // pred_region
          %v427 = vld [vmem:[#allocation2] sm:$0xff]
          %v428 = vld [vmem:[#allocation2 + $0x8] sm:$0xff]
          %v429 = vsel %vm414, %v427, 0.0
          %v430 = vsel %vm414, %v428, 0.0
          %v431 = vadd.f32 %v429, %v430
          %432 = vadd.xlane.f32.xlu0 %v431
          %v433 = vpop.xlane.xlu0 %432
          %v434 = vrot.slane %v433, 4
          %v435 = vadd.f32 %v433, %v434
          %v436 = vrot.slane %v435, 2
          %v437 = vadd.f32 %v435, %v436
          %v438 = vrot.slane %v437, 1
          %v439 = vadd.f32 %v437, %v438
          %s440 = vtos %v439
          %v441 = vld [vmem:[#allocation3] sm:$0xff]
          %v442 = vld [vmem:[#allocation3 + $0x8] sm:$0xff]
          %v443 = vsel %vm414, %v441, 0.0
          %v444 = vsel %vm414, %v442, 0.0
          %v445 = vadd.f32 %v443, %v444
          %446 = vadd.xlane.f32.xlu0 %v445
          %v447 = vpop.xlane.xlu0 %446
          %v448 = vrot.slane %v447, 4
          %v449 = vadd.f32 %v447, %v448
          %v450 = vrot.slane %v449, 2
          %v451 = vadd.f32 %v449, %v450
          %v452 = vrot.slane %v451, 1
          %v453 = vadd.f32 %v451, %v452
          %s454 = vtos %v453
          %vm455 = vcmp.eq.s32.totalorder %v338, 0
          %vm456 = vcmp.eq.s32.totalorder %v338, 1
          %v457 = vstv %s454
          %v458 = vsel %vm456, %v457, 0.0
          %v459 = vstv %s440
          %v460 = vsel %vm455, %v459, %v458
          %461 = vst [vmem:[%s268] sm:$0xff] %v460
        $region40: #{tpu_custom_call.1} parent=31 // pred_fallthru
          _
        %s462 = sand.u32 %s139, 1
        %s463 = scalar_lea.sflag [#allocation5], %s462
        %s464 = sand.u32 %s139, 1
        %s465 = smul.addr %s464, 8
        %s466 = scalar_lea.vmem [#allocation4], %s465
        // Predicated region
        $region41: #{tpu_custom_call.1} parent=31 // pred_check
          %p467 = pneg %p149
        $region42: #{tpu_custom_call.1} parent=31 // pred_check_branch
          %469 = sbr.rel (%p467) target = $region44
        $region43: #{tpu_custom_call.1} parent=31 // pred_region
          %s471 = ssub.s32 128, 128
          %472 = vsyncadd %s463, %s471
          %s473 = smul.addr %s21, 128
          %s474 = scalar_lea.hbm %s3, %s473
          %s476 = sshll.u32 %s466, 4
          %s477 = int_to_ptr.vmem [resolvable:$true] %s476
          %479 = dma.vmem_to_hbm [thread:$0]  %s477, 128, %s474, %s463
        $region44: #{tpu_custom_call.1} parent=31 // pred_fallthru
          _
      $region32: #{tpu_custom_call.1} parent=5 // pred_fallthru
        _
      %p480 = scmp.le.s32.totalorder 2, %s12
      // Predicated region
      $region45: #{tpu_custom_call.1} parent=5 // pred_check
        %p481 = pneg %p480
      $region46: #{tpu_custom_call.1} parent=5 // pred_check_branch
        %483 = sbr.rel (%p481) target = $region48
      $region47: #{tpu_custom_call.1} parent=5 // pred_region
        %s484 = ssub.s32 %s12, 2
        // Predicated region
        $region49: #{tpu_custom_call.1} parent=47 // pred_check
          %p485 = pneg %p155
        $region50: #{tpu_custom_call.1} parent=47 // pred_check_branch
          %487 = sbr.rel (%p485) target = $region52
        $region51: #{tpu_custom_call.1} parent=47 // pred_region
          %s488 = sand.u32 %s140, 1
          %s489 = scalar_lea.sflag [#allocation5], %s488
          %s490 = sand.u32 %s140, 1
          %s491 = smul.addr %s490, 8
          %s492 = scalar_lea.vmem [#allocation4], %s491
          %493 = dma.done %s489, 128
        $region52: #{tpu_custom_call.1} parent=47 // pred_fallthru
          _
      $region48: #{tpu_custom_call.1} parent=5 // pred_fallthru
        _
    $region6: #{tpu_custom_call.1} parent=1 // loop_footer
      %s16 = sadd.s32 1, %s12
    $region7: #{tpu_custom_call.1} parent=1 // loop_footer_branch
      %11 = sbr.rel target = $region3
    $region8: #{tpu_custom_call.1} parent=1 // loop_exit
      _
    %494 = vsyncpa [#allocation5], 1
    %s495 = scalar_lea.sflag [#allocation5], 1
    %496 = vsyncpa %s495, 1

</llo_original>
